<compile_context>
chip_gen: v7x
topology: tpu7x:2x2x1
jax: 0.10.0
libtpu: 0.0.40
codegen_flags: <defaults>
</compile_context>

<pallas_src>
import functools

import jax
import jax.numpy as jnp
from jax import lax
from jax.experimental import pallas as pl
from jax.experimental.pallas import tpu as pltpu


def _round_up(x, m):
    return -(-x // m) * m


# ----------------------------------------------------------------------------
# Fused kernel: phase 0 = spatial-mean reduce + linear + sigmoid (gate in VMEM)
#               phase 1 = out = x_prev * gate
# ----------------------------------------------------------------------------
def _fused_gate_kernel(xp_ref, xn_ref, wp_ref, wn_ref, o_ref,
                       sp_acc, sn_acc, g_ref, xp_cache,
                       *, inv_hw, spatial, tile, acc_w, needs_mask, cache_xp):
    """grid = (batch_blocks, phase, spatial_tiles).

    xp_ref, xn_ref : (bb, C, ts)    spatial tile of x_prev / x
    wp_ref, wn_ref : (C, C)         pre-split transposed Linear weight (f32)
    o_ref          : (bb, C, ts)    gated x_prev tile (written in phase 1 only)
    sp_acc, sn_acc : (bb, C, acc_w) f32 lane-shaped running sums
    g_ref          : (bb, C, 1)     sigmoid gate, activation dtype
    xp_cache       : (T, bb, C, ts) x_prev residency cache (if cache_xp)
    """
    p = pl.program_id(1)
    s = pl.program_id(2)
    last = pl.num_programs(2) - 1

    # ---------------- phase 0: reduce + gate ----------------
    @pl.when(p == 0)
    def _reduce():
        @pl.when(s == 0)
        def _():
            sp_acc[...] = jnp.zeros_like(sp_acc)
            sn_acc[...] = jnp.zeros_like(sn_acc)

        xp = xp_ref[...]
        xn = xn_ref[...]

        if cache_xp:
            xp_cache[s] = xp                       # park the tile for phase 1

        xp32 = xp.astype(jnp.float32)
        xn32 = xn.astype(jnp.float32)

        if needs_mask:
            # Zero the padded lanes of the tail tile (S not a multiple of ts).
            lane = lax.broadcasted_iota(jnp.int32, xp32.shape, dimension=2)
            valid = lane < (spatial - s * tile)
            xp32 = jnp.where(valid, xp32, 0.0)
            xn32 = jnp.where(valid, xn32, 0.0)

        # Fold lane groups with pure VPU adds into the lane-shaped accumulator;
        # the cross-lane (XLU) fold and the (bb, C) relayout are deferred to the
        # final step so they run once instead of once per tile.
        psum_p = xp32[:, :, 0:acc_w]
        psum_n = xn32[:, :, 0:acc_w]
        for k in range(1, tile // acc_w):
            psum_p = psum_p + xp32[:, :, k * acc_w:(k + 1) * acc_w]
            psum_n = psum_n + xn32[:, :, k * acc_w:(k + 1) * acc_w]
        sp_acc[...] += psum_p
        sn_acc[...] += psum_n

        @pl.when(s == last)
        def _gate():
            mp = jnp.sum(sp_acc[...], axis=-1) * inv_hw          # (bb, C) mean
            mn = jnp.sum(sn_acc[...], axis=-1) * inv_hw
            # concat([mp, mn]) @ W^T == mp @ Wt[:C] + mn @ Wt[C:]  (pre-split)
            logits = (jnp.dot(mp, wp_ref[...], preferred_element_type=jnp.float32)
                      + jnp.dot(mn, wn_ref[...], preferred_element_type=jnp.float32))
            gate = jax.nn.sigmoid(logits)
            # Single lane->sublane relayout; the apply phase only lane-broadcasts.
            g_ref[...] = gate[:, :, None].astype(g_ref.dtype)

    # ---------------- phase 1: apply the gate ----------------
    @pl.when(p == 1)
    def _apply():
        if cache_xp:
            xv = xp_cache[s]
        else:
            xv = xp_ref[...]
        o_ref[...] = (xv * g_ref[...]).astype(o_ref.dtype)


# ----------------------------------------------------------------------------
# Wrapper
# ----------------------------------------------------------------------------
def linear_concat_gate(x_prev, x, w_linear, *, force_tile=None, force_cache=None):
    """LinearConcatGate forward.

    x_prev, x : (B, C, H, W)  activations (PyTorch NCHW layout)
    w_linear  : (C, 2C)       nn.Linear(2C, C, bias=False).weight
    returns   : (B, C, H, W)  x_prev scaled by the per-(b, c) sigmoid gate
    """
    B, C, H, W = x_prev.shape
    S = H * W
    dtype = x_prev.dtype
    itemsize = jnp.dtype(dtype).itemsize

    # (B, C, S): spatial on the lane axis -> lane-dense loads/stores, no
    # NCHW<->NHWC transpose through HBM.
    xp = x_prev.reshape(B, C, S)
    xn = x.reshape(B, C, S)

    # Pre-split the transposed weight in the wrapper so the kernel never slices
    # at the (sublane-unaligned) offset C.
    wt = jnp.transpose(w_linear).astype(jnp.float32)        # (2C, C)
    w_prev = wt[:C, :]
    w_next = wt[C:, :]

    # ---- megacore: split the batch across a leading "parallel" grid axis ----
    nb = 2 if (B >= 2 and B % 2 == 0) else 1
    bb = B // nb

    # ---- generation-aware VMEM budget ----
    try:
        vmem_cap = int(pltpu.get_tpu_info().vmem_capacity_bytes)
    except Exception:
        vmem_cap = 64 * 1024 * 1024                 # conservative (v7x per-core)
    usable = min(int(vmem_cap * 0.6), 48 << 20)
    tile_budget = min(usable // 2, 24 << 20)

    sub_granule = max(8, 32 // itemsize)            # sublane packing granule
    c_pad = _round_up(C, sub_granule)

    # ---- spatial tile: always a 128-multiple; masked tail handles the rest ---
    if force_tile is not None:
        ts = int(force_tile)
        assert ts == S or ts % 128 == 0
    elif S < 128:
        ts = S                                      # single, sub-vreg tile
    else:
        ts_cap = min((S // 128) * 128, 4096)
        per_lane = 6 * bb * c_pad * itemsize        # xp/xn/out double buffers
        ts = max(128, min(ts_cap, (tile_budget // per_lane // 128) * 128))
        # TODO(synk): if even ts=128 exceeds the budget (very large B*C), split
        #             B or C over an extra grid axis instead of clamping here.

    num_tiles = -(-S // ts)
    needs_mask = (S % ts) != 0
    acc_w = min(128, ts)                            # lane width of f32 accumulators
    ts_pad = _round_up(ts, 128)

    # ---- keep x_prev resident in VMEM when it fits (saves a full HBM read) --
    stream_bytes = 6 * bb * c_pad * ts_pad * itemsize + (2 << 20)
    cache_bytes = num_tiles * bb * c_pad * ts_pad * itemsize
    if force_cache is not None:
        cache_xp = bool(force_cache)
    else:
        cache_xp = (stream_bytes + cache_bytes) <= usable

    usage = stream_bytes + (cache_bytes if cache_xp else 0)
    vmem_limit = min(int(vmem_cap * 0.9), max(32 << 20, usage + (16 << 20)))

    # ---- grid & specs ----
    grid = (nb, 2, num_tiles)
    last = num_tiles - 1

    if cache_xp:
        # Phase 1 reads x_prev from the VMEM cache: park the index at the last
        # phase-0 block so no extra x_prev DMAs are issued in phase 1.
        xp_index = lambda b, p, s: (b, 0, (1 - p) * s + p * last)
    else:
        xp_index = lambda b, p, s: (b, 0, s)
    xn_index = lambda b, p, s: (b, 0, (1 - p) * s + p * last)   # phase 0 only
    w_index = lambda b, p, s: (0, 0)
    out_index = lambda b, p, s: (b, 0, p * s)   # constant in phase 0 -> no garbage writeback

    cache_shape = (num_tiles, bb, C, ts) if cache_xp else (1, 1, 1, 128)

    out = pl.pallas_call(
        functools.partial(
            _fused_gate_kernel,
            inv_hw=1.0 / float(S), spatial=S, tile=ts, acc_w=acc_w,
            needs_mask=needs_mask, cache_xp=cache_xp),
        out_shape=jax.ShapeDtypeStruct((B, C, S), dtype),
        grid=grid,
        in_specs=[
            pl.BlockSpec((bb, C, ts), xp_index),
            pl.BlockSpec((bb, C, ts), xn_index),
            pl.BlockSpec((C, C), w_index),
            pl.BlockSpec((C, C), w_index),
        ],
        out_specs=pl.BlockSpec((bb, C, ts), out_index),
        scratch_shapes=[
            pltpu.VMEM((bb, C, acc_w), jnp.float32),    # running sum of x_prev
            pltpu.VMEM((bb, C, acc_w), jnp.float32),    # running sum of x
            pltpu.VMEM((bb, C, 1), dtype),              # sigmoid gate
            pltpu.VMEM(cache_shape, dtype),             # optional x_prev residency
        ],
        compiler_params=pltpu.CompilerParams(
            dimension_semantics=("parallel", "arbitrary", "arbitrary"),
            vmem_limit_bytes=int(vmem_limit)),
        cost_estimate=pl.CostEstimate(
            flops=2 * B * (2 * C) * C + B * C * S,
            transcendentals=B * C,
            bytes_accessed=(3 if cache_xp else 4) * B * C * S * itemsize + 2 * C * C * 4),
    )(xp, xn, w_prev, w_next)

    return out.reshape(B, C, H, W)


# ----------------------------------------------------------------------------
# Pure-JAX reference (mirrors the PyTorch module)
# ----------------------------------------------------------------------------
def _reference(x_prev, x, w_linear):
    x_cat = jnp.concatenate([x_prev, x], axis=1)             # (B, 2C, H, W)
    y = jnp.mean(x_cat.astype(jnp.float32), axis=(2, 3))     # (B, 2C)
    g = jax.nn.sigmoid(y @ jnp.transpose(w_linear).astype(jnp.float32))
    return x_prev * g[:, :, None, None].astype(x_prev.dtype)


# ----------------------------------------------------------------------------
if __name__ == "__main__":
    root = jax.random.PRNGKey(0)

    def run_case(idx, B, C, H, W, **kw):
        k1, k2, k3 = jax.random.split(jax.random.fold_in(root, idx), 3)
        x_prev = jax.random.normal(k1, (B, C, H, W), dtype=jnp.float32)
        x = jax.random.normal(k2, (B, C, H, W), dtype=jnp.float32)
        w_linear = 0.2 * jax.random.normal(k3, (C, 2 * C), dtype=jnp.float32)

        fwd = jax.jit(functools.partial(linear_concat_gate, **kw))
        out = fwd(x_prev, x, w_linear)
        jax.block_until_ready(out)

        ref = _reference(x_prev, x, w_linear)
        assert out.shape == x_prev.shape
        err = float(jnp.max(jnp.abs(out - ref)))
        assert err < 1e-4, f"case {idx} {(B, C, H, W, kw)}: max err = {err}"

    # cached x_prev, single spatial tile, batch split across the parallel axis
    run_case(0, 2, 8, 16, 16)
    # streaming path (no cache), S=130 -> two tiles with a masked tail
    run_case(1, 2, 8, 10, 13, force_cache=False)
    # odd batch (no megacore split), multi-tile with the VMEM residency cache
    run_case(2, 3, 16, 8, 48, force_tile=128)
    print("KERNEL_OK")
</pallas_src>

<mosaic_0001>
module attributes {stable_mosaic.version = 11 : i64} {
  func.func @_fused_gate_kernel(%arg0: i32, %arg1: i32, %arg2: i32, %arg3: memref<1x8x256xf32, #tpu.memory_space<vmem>>, %arg4: memref<1x8x256xf32, #tpu.memory_space<vmem>>, %arg5: memref<8x8xf32, #tpu.memory_space<vmem>>, %arg6: memref<8x8xf32, #tpu.memory_space<vmem>>, %arg7: memref<1x8x256xf32, #tpu.memory_space<vmem>>, %arg8: memref<1x8x128xf32, #tpu.memory_space<vmem>>, %arg9: memref<1x8x128xf32, #tpu.memory_space<vmem>>, %arg10: memref<1x8x1xf32, #tpu.memory_space<vmem>>, %arg11: memref<1x1x8x256xf32, #tpu.memory_space<vmem>>) attributes {dimension_semantics = [#tpu.dimension_semantics<parallel>, #tpu.dimension_semantics<arbitrary>, #tpu.dimension_semantics<arbitrary>], iteration_bounds = array<i64: 2, 2, 1>, scalar_prefetch = 0 : i64, scratch_operands = 4 : i64, tpu.core_type = #tpu.core_type<tc>, window_params = [{transform_indices = @transform_0, window_bounds = array<i64: 1, 8, 256>}, {transform_indices = @transform_1, window_bounds = array<i64: 1, 8, 256>}, {pipeline_mode = #tpu.pipeline_mode<synchronous>, transform_indices = @transform_2, window_bounds = array<i64: 8, 8>}, {pipeline_mode = #tpu.pipeline_mode<synchronous>, transform_indices = @transform_3, window_bounds = array<i64: 8, 8>}, {transform_indices = @transform_4, window_bounds = array<i64: 1, 8, 256>}]} {
    %c0_i32 = arith.constant 0 : i32
    %0 = arith.cmpi eq, %arg1, %c0_i32 : i32
    %1 = arith.extui %0 : i1 to i32
    %c0_i32_0 = arith.constant 0 : i32
    %2 = arith.cmpi ne, %1, %c0_i32_0 : i32
    scf.if %2 {
      %c0_i32_2 = arith.constant 0 : i32
      %6 = arith.cmpi eq, %arg2, %c0_i32_2 : i32
      %7 = arith.extui %6 : i1 to i32
      %c0_i32_3 = arith.constant 0 : i32
      %8 = arith.cmpi ne, %7, %c0_i32_3 : i32
      scf.if %8 {
        %cst = arith.constant 0.000000e+00 : f32
        %30 = vector.broadcast %cst : f32 to vector<1x8x128xf32>
        %c0_26 = arith.constant 0 : index
        %c0_27 = arith.constant 0 : index
        %c0_28 = arith.constant 0 : index
        %31 = vector.load %arg8[%c0_26, %c0_27, %c0_28] : memref<1x8x128xf32, #tpu.memory_space<vmem>>, vector<1x8x128xf32>
        tpu.vector_store %arg8[%c0_26, %c0_27, %c0_28], %30 {strides = array<i32>} : memref<1x8x128xf32, #tpu.memory_space<vmem>>, vector<1x8x128xf32>,
        %cst_29 = arith.constant 0.000000e+00 : f32
        %32 = vector.broadcast %cst_29 : f32 to vector<1x8x128xf32>
        %c0_30 = arith.constant 0 : index
        %c0_31 = arith.constant 0 : index
        %c0_32 = arith.constant 0 : index
        %33 = vector.load %arg9[%c0_30, %c0_31, %c0_32] : memref<1x8x128xf32, #tpu.memory_space<vmem>>, vector<1x8x128xf32>
        tpu.vector_store %arg9[%c0_30, %c0_31, %c0_32], %32 {strides = array<i32>} : memref<1x8x128xf32, #tpu.memory_space<vmem>>, vector<1x8x128xf32>,
      } else {
      }
      %c0 = arith.constant 0 : index
      %c0_4 = arith.constant 0 : index
      %c0_5 = arith.constant 0 : index
      %9 = vector.load %arg3[%c0, %c0_4, %c0_5] : memref<1x8x256xf32, #tpu.memory_space<vmem>>, vector<1x8x256xf32>
      %c0_6 = arith.constant 0 : index
      %c0_7 = arith.constant 0 : index
      %c0_8 = arith.constant 0 : index
      %10 = vector.load %arg4[%c0_6, %c0_7, %c0_8] : memref<1x8x256xf32, #tpu.memory_space<vmem>>, vector<1x8x256xf32>
      %11 = arith.index_cast %arg2 : i32 to index
      %c0_9 = arith.constant 0 : index
      %c0_10 = arith.constant 0 : index
      %c0_11 = arith.constant 0 : index
      %12 = vector.load %arg11[%11, %c0_9, %c0_10, %c0_11] : memref<1x1x8x256xf32, #tpu.memory_space<vmem>>, vector<1x1x8x256xf32>
      %13 = vector.shape_cast %12 : vector<1x1x8x256xf32> to vector<1x8x256xf32>
      %14 = vector.shape_cast %9 : vector<1x8x256xf32> to vector<1x1x8x256xf32>
      tpu.vector_store %arg11[%11, %c0_9, %c0_10, %c0_11], %14 {strides = array<i32>} : memref<1x1x8x256xf32, #tpu.memory_space<vmem>>, vector<1x1x8x256xf32>,
      %15 = vector.extract_strided_slice %9 {offsets = [0, 0, 0], sizes = [1, 8, 128], strides = [1, 1, 1]} : vector<1x8x256xf32> to vector<1x8x128xf32>
      %16 = vector.extract_strided_slice %10 {offsets = [0, 0, 0], sizes = [1, 8, 128], strides = [1, 1, 1]} : vector<1x8x256xf32> to vector<1x8x128xf32>
      %17 = vector.extract_strided_slice %9 {offsets = [0, 0, 128], sizes = [1, 8, 128], strides = [1, 1, 1]} : vector<1x8x256xf32> to vector<1x8x128xf32>
      %18 = arith.addf %15, %17 : vector<1x8x128xf32>
      %19 = vector.extract_strided_slice %10 {offsets = [0, 0, 128], sizes = [1, 8, 128], strides = [1, 1, 1]} : vector<1x8x256xf32> to vector<1x8x128xf32>
      %20 = arith.addf %16, %19 : vector<1x8x128xf32>
      %c0_12 = arith.constant 0 : index
      %c0_13 = arith.constant 0 : index
      %c0_14 = arith.constant 0 : index
      %21 = vector.load %arg8[%c0_12, %c0_13, %c0_14] : memref<1x8x128xf32, #tpu.memory_space<vmem>>, vector<1x8x128xf32>
      %22 = arith.addf %21, %18 : vector<1x8x128xf32>
      %c0_15 = arith.constant 0 : index
      %c0_16 = arith.constant 0 : index
      %c0_17 = arith.constant 0 : index
      %23 = vector.load %arg8[%c0_15, %c0_16, %c0_17] : memref<1x8x128xf32, #tpu.memory_space<vmem>>, vector<1x8x128xf32>
      tpu.vector_store %arg8[%c0_15, %c0_16, %c0_17], %22 {strides = array<i32>} : memref<1x8x128xf32, #tpu.memory_space<vmem>>, vector<1x8x128xf32>,
      %c0_18 = arith.constant 0 : index
      %c0_19 = arith.constant 0 : index
      %c0_20 = arith.constant 0 : index
      %24 = vector.load %arg9[%c0_18, %c0_19, %c0_20] : memref<1x8x128xf32, #tpu.memory_space<vmem>>, vector<1x8x128xf32>
      %25 = arith.addf %24, %20 : vector<1x8x128xf32>
      %c0_21 = arith.constant 0 : index
      %c0_22 = arith.constant 0 : index
      %c0_23 = arith.constant 0 : index
      %26 = vector.load %arg9[%c0_21, %c0_22, %c0_23] : memref<1x8x128xf32, #tpu.memory_space<vmem>>, vector<1x8x128xf32>
      tpu.vector_store %arg9[%c0_21, %c0_22, %c0_23], %25 {strides = array<i32>} : memref<1x8x128xf32, #tpu.memory_space<vmem>>, vector<1x8x128xf32>,
      %c0_i32_24 = arith.constant 0 : i32
      %27 = arith.cmpi eq, %arg2, %c0_i32_24 : i32
      %28 = arith.extui %27 : i1 to i32
      %c0_i32_25 = arith.constant 0 : i32
      %29 = arith.cmpi ne, %28, %c0_i32_25 : i32
      scf.if %29 {
        %c0_26 = arith.constant 0 : index
        %c0_27 = arith.constant 0 : index
        %c0_28 = arith.constant 0 : index
        %30 = vector.load %arg8[%c0_26, %c0_27, %c0_28] : memref<1x8x128xf32, #tpu.memory_space<vmem>>, vector<1x8x128xf32>
        %cst = arith.constant dense<0.000000e+00> : vector<1x8xf32>
        %31 = vector.multi_reduction <add>, %30, %cst [2] : vector<1x8x128xf32> to vector<1x8xf32>
        %cst_29 = arith.constant 3.906250e-03 : f32
        %32 = vector.broadcast %cst_29 : f32 to vector<1x8xf32>
        %33 = arith.mulf %31, %32 : vector<1x8xf32>
        %c0_30 = arith.constant 0 : index
        %c0_31 = arith.constant 0 : index
        %c0_32 = arith.constant 0 : index
        %34 = vector.load %arg9[%c0_30, %c0_31, %c0_32] : memref<1x8x128xf32, #tpu.memory_space<vmem>>, vector<1x8x128xf32>
        %cst_33 = arith.constant dense<0.000000e+00> : vector<1x8xf32>
        %35 = vector.multi_reduction <add>, %34, %cst_33 [2] : vector<1x8x128xf32> to vector<1x8xf32>
        %cst_34 = arith.constant 3.906250e-03 : f32
        %36 = vector.broadcast %cst_34 : f32 to vector<1x8xf32>
        %37 = arith.mulf %35, %36 : vector<1x8xf32>
        %c0_35 = arith.constant 0 : index
        %c0_36 = arith.constant 0 : index
        %38 = vector.load %arg5[%c0_35, %c0_36] : memref<8x8xf32, #tpu.memory_space<vmem>>, vector<8x8xf32>
        %cst_37 = arith.constant dense<0.000000e+00> : vector<1x8xf32>
        %39 = tpu.matmul %33, %38, %cst_37 {dimension_numbers = #tpu.dot_dimension_numbers<[1], [0], [0], [1], [0, 0, 1, 1], [], []>} : vector<1x8xf32>, vector<8x8xf32>, vector<1x8xf32> -> vector<1x8xf32>
        %c0_38 = arith.constant 0 : index
        %c0_39 = arith.constant 0 : index
        %40 = vector.load %arg6[%c0_38, %c0_39] : memref<8x8xf32, #tpu.memory_space<vmem>>, vector<8x8xf32>
        %cst_40 = arith.constant dense<0.000000e+00> : vector<1x8xf32>
        %41 = tpu.matmul %37, %40, %cst_40 {dimension_numbers = #tpu.dot_dimension_numbers<[1], [0], [0], [1], [0, 0, 1, 1], [], []>} : vector<1x8xf32>, vector<8x8xf32>, vector<1x8xf32> -> vector<1x8xf32>
        %42 = arith.addf %39, %41 : vector<1x8xf32>
        %43 = arith.negf %42 : vector<1x8xf32>
        %44 = math.exp %43 : vector<1x8xf32>
        %cst_41 = arith.constant 1.000000e+00 : f32
        %45 = vector.broadcast %cst_41 : f32 to vector<1x8xf32>
        %46 = arith.addf %45, %44 : vector<1x8xf32>
        %47 = arith.divf %45, %46 : vector<1x8xf32>
        %48 = vector.shape_cast %47 : vector<1x8xf32> to vector<1x8x1xf32>
        %c0_42 = arith.constant 0 : index
        %c0_43 = arith.constant 0 : index
        %c0_44 = arith.constant 0 : index
        %49 = vector.load %arg10[%c0_42, %c0_43, %c0_44] : memref<1x8x1xf32, #tpu.memory_space<vmem>>, vector<1x8x1xf32>
        tpu.vector_store %arg10[%c0_42, %c0_43, %c0_44], %48 {strides = array<i32>} : memref<1x8x1xf32, #tpu.memory_space<vmem>>, vector<1x8x1xf32>,
      } else {
      }
    } else {
    }
    %c1_i32 = arith.constant 1 : i32
    %3 = arith.cmpi eq, %arg1, %c1_i32 : i32
    %4 = arith.extui %3 : i1 to i32
    %c0_i32_1 = arith.constant 0 : i32
    %5 = arith.cmpi ne, %4, %c0_i32_1 : i32
    scf.if %5 {
      %6 = arith.index_cast %arg2 : i32 to index
      %c0 = arith.constant 0 : index
      %c0_2 = arith.constant 0 : index
      %c0_3 = arith.constant 0 : index
      %7 = vector.load %arg11[%6, %c0, %c0_2, %c0_3] : memref<1x1x8x256xf32, #tpu.memory_space<vmem>>, vector<1x1x8x256xf32>
      %8 = vector.shape_cast %7 : vector<1x1x8x256xf32> to vector<1x8x256xf32>
      %c0_4 = arith.constant 0 : index
      %c0_5 = arith.constant 0 : index
      %c0_6 = arith.constant 0 : index
      %9 = vector.load %arg10[%c0_4, %c0_5, %c0_6] : memref<1x8x1xf32, #tpu.memory_space<vmem>>, vector<1x8x1xf32>
      %10 = vector.broadcast %9 : vector<1x8x1xf32> to vector<1x8x256xf32>
      %11 = arith.mulf %8, %10 : vector<1x8x256xf32>
      %c0_7 = arith.constant 0 : index
      %c0_8 = arith.constant 0 : index
      %c0_9 = arith.constant 0 : index
      %12 = vector.load %arg7[%c0_7, %c0_8, %c0_9] : memref<1x8x256xf32, #tpu.memory_space<vmem>>, vector<1x8x256xf32>
      tpu.vector_store %arg7[%c0_7, %c0_8, %c0_9], %11 {strides = array<i32>} : memref<1x8x256xf32, #tpu.memory_space<vmem>>, vector<1x8x256xf32>,
    } else {
    }
    return
  }
  func.func @transform_0(%arg0: i32, %arg1: i32, %arg2: i32) -> (i32, i32, i32) {
    %c1_i32 = arith.constant 1 : i32
    %0 = arith.subi %c1_i32, %arg1 : i32
    %1 = arith.muli %0, %arg2 : i32
    %c0_i32 = arith.constant 0 : i32
    %2 = arith.muli %arg1, %c0_i32 : i32
    %3 = arith.addi %1, %2 : i32
    %c0_i32_0 = arith.constant 0 : i32
    %c0_i32_1 = arith.constant 0 : i32
    return %arg0, %c0_i32_0, %3 : i32, i32, i32
  }
  func.func @transform_1(%arg0: i32, %arg1: i32, %arg2: i32) -> (i32, i32, i32) {
    %c1_i32 = arith.constant 1 : i32
    %0 = arith.subi %c1_i32, %arg1 : i32
    %1 = arith.muli %0, %arg2 : i32
    %c0_i32 = arith.constant 0 : i32
    %2 = arith.muli %arg1, %c0_i32 : i32
    %3 = arith.addi %1, %2 : i32
    %c0_i32_0 = arith.constant 0 : i32
    %c0_i32_1 = arith.constant 0 : i32
    return %arg0, %c0_i32_0, %3 : i32, i32, i32
  }
  func.func @transform_2(%arg0: i32, %arg1: i32, %arg2: i32) -> (i32, i32) {
    %c0_i32 = arith.constant 0 : i32
    %c0_i32_0 = arith.constant 0 : i32
    %c0_i32_1 = arith.constant 0 : i32
    return %c0_i32, %c0_i32_0 : i32, i32
  }
  func.func @transform_3(%arg0: i32, %arg1: i32, %arg2: i32) -> (i32, i32) {
    %c0_i32 = arith.constant 0 : i32
    %c0_i32_0 = arith.constant 0 : i32
    %c0_i32_1 = arith.constant 0 : i32
    return %c0_i32, %c0_i32_0 : i32, i32
  }
  func.func @transform_4(%arg0: i32, %arg1: i32, %arg2: i32) -> (i32, i32, i32) {
    %0 = arith.muli %arg1, %arg2 : i32
    %c0_i32 = arith.constant 0 : i32
    %c0_i32_0 = arith.constant 0 : i32
    return %arg0, %c0_i32, %0 : i32, i32, i32
  }
}

</mosaic_0001>

<llo_original>
// kernel: linear_concat_gate.1
$region0: #{linear_concat_gate.1}
  #allocation0 [shape = 'u32[]', space=smem, size = 0x4, offset = 0x4, fixed_abs, tag = 'smem constant byte address 0x4 - core index']
  #allocation1 [shape = 'u32[144,128]{1,0:T(1,128)}', space=vmem, size = 0x12000, scoped, tag = 'internal scratch']
  #allocation2 [shape = 'f32[1,8,128]{2,1,0:T(8,128)}', space=vmem, size = 0x1000, scoped, tag = 'scratch operand']
  #allocation3 [shape = 'f32[1,8,128]{2,1,0:T(8,128)}', space=vmem, size = 0x1000, scoped, tag = 'scratch operand']
  #allocation4 [shape = 'f32[1,8,1]{2,1,0:T(8,128)}', space=vmem, size = 0x1000, scoped, tag = 'scratch operand']
  #allocation5 [shape = 'f32[1,1,8,256]{3,2,1,0:T(8,128)}', space=vmem, size = 0x2000, scoped, tag = 'scratch operand']
  %s0 = inlined_call_operand.vmem [shape: f32[2,8,256], index: 0, kind: input, shape index: {}]
  %s1 = inlined_call_operand.vmem [shape: f32[2,8,256], index: 1, kind: input, shape index: {}]
  %s2 = inlined_call_operand.vmem [shape: f32[8,8], index: 2, kind: input, shape index: {}]
  %s3 = inlined_call_operand.vmem [shape: f32[8,8], index: 3, kind: input, shape index: {}]
  %s4 = inlined_call_operand.vmem [shape: f32[2,8,256], index: 4, kind: output, shape index: {}]
  %s5 = sld [smem:[#allocation0]]
  $region65: #{linear_concat_gate.1} parent=0
    _
  %s7 = ssub.s32 1, %s5
  %s8 = scalar_select 0, %s7, %s5
  loop: start=0, step=1, limit=6
  $region2: #{linear_concat_gate.1} parent=0 // loop_pre_header
    _
  $region3: #{linear_concat_gate.1} parent=0 // loop_header
    %s10 = sphi 0, %s14
    %p11 = scmp.ge.s32.totalorder %s10, 6
    %s17 = sphi 0, %s36
    %s18 = sphi 0, %s32
    %s19 = sphi 0, %s28
    %s20 = sphi 0, %s17
    %s21 = sphi 0, %s18
    %s22 = sphi 0, %s19
    %s23 = sphi 0, %s20
    %s24 = sphi 0, %s21
    %s25 = sphi 0, %s22
    %s45 = sphi 0, %s47
    %s48 = sphi 0, %s45
    %s49 = sphi 0, %s48
    %s65 = sphi 0, %s49
    %s77 = sphi 0, %s79
    %s80 = sphi 0, %s77
    %s81 = sphi 0, %s80
    %s97 = sphi 0, %s81
    %s101 = sphi 0, %s101
    %s103 = sphi 0, %s101
    %s104 = sphi 0, %s103
    %s118 = sphi 0, %s104
    %s122 = sphi 0, %s122
    %s124 = sphi 0, %s122
    %s125 = sphi 0, %s124
    %s139 = sphi 0, %s125
    %s149 = sphi 0, %s151
    %s152 = sphi 0, %s149
    %s153 = sphi 0, %s152
    %s169 = sphi 0, %s153
  $region4: #{linear_concat_gate.1} parent=0 // loop_header_branch
    %13 = sbr.rel (%p11) target = $region8
  $region5: #{linear_concat_gate.1} parent=0 // loop_body
    %s15 = ssub.s32 %s10, 1
    %s16 = ssub.s32 %s10, 2
    %s26 = sadd.s32 1, %s19
    %p27 = scmp.ge.s32.totalorder %s26, 1
    %s28 = scalar_select %p27, 0, %s26
    %s29 = sadd.s32 1, %s18
    %s30 = scalar_select %p27, %s29, %s18
    %p31 = scmp.ge.s32.totalorder %s30, 2
    %s32 = scalar_select %p31, 0, %s30
    %s33 = sadd.s32 1, %s17
    %s34 = scalar_select %p31, %s33, %s17
    %p35 = scmp.ge.s32.totalorder %s34, 2
    %s36 = scalar_select %p35, 0, %s34
    %s37 = ssub.s32 1, %s18
    %s38 = smul.u32 %s37, %s19
    %s39 = ssub.s32 1, %s32
    %s40 = smul.u32 %s39, %s28
    %s41 = ssub.s32 %s17, %s36
    %s42 = ssub.s32 %s38, %s40
    %s43 = sor.u32 %s41, %s42
    %p44 = scmp.eq.s32.totalorder %s43, 0
    %s46 = sadd.s32 %s45, 1
    %s47 = scalar_select %p44, %s45, %s46
    %p50 = pneg %p44
    %p51 = scmp.eq.s32.totalorder %s10, 3
    %p52 = por %p50, %p51
    %p53 = scmp.ne.s32.totalorder %s45, %s48
    %p54 = scmp.eq.s32.totalorder %s10, 0
    %p55 = por %p53, %p54
    %p56 = scmp.ne.s32.totalorder %s45, %s48
    %p57 = scmp.eq.s32.totalorder %s15, 3
    %p58 = por %p56, %p57
    %p59 = scmp.ne.s32.totalorder %s48, %s49
    %p60 = scmp.eq.s32.totalorder %s15, 0
    %p61 = por %p59, %p60
    %p62 = scmp.ne.s32.totalorder %s48, %s49
    %p63 = scmp.eq.s32.totalorder %s16, 3
    %p64 = por %p62, %p63
    %p66 = scmp.ne.s32.totalorder %s49, %s65
    %p67 = scmp.eq.s32.totalorder %s16, 0
    %p68 = por %p66, %p67
    %s69 = ssub.s32 1, %s18
    %s70 = smul.u32 %s69, %s19
    %s71 = ssub.s32 1, %s32
    %s72 = smul.u32 %s71, %s28
    %s73 = ssub.s32 %s17, %s36
    %s74 = ssub.s32 %s70, %s72
    %s75 = sor.u32 %s73, %s74
    %p76 = scmp.eq.s32.totalorder %s75, 0
    %s78 = sadd.s32 %s77, 1
    %s79 = scalar_select %p76, %s77, %s78
    %p82 = pneg %p76
    %p83 = scmp.eq.s32.totalorder %s10, 3
    %p84 = por %p82, %p83
    %p85 = scmp.ne.s32.totalorder %s77, %s80
    %p86 = scmp.eq.s32.totalorder %s10, 0
    %p87 = por %p85, %p86
    %p88 = scmp.ne.s32.totalorder %s77, %s80
    %p89 = scmp.eq.s32.totalorder %s15, 3
    %p90 = por %p88, %p89
    %p91 = scmp.ne.s32.totalorder %s80, %s81
    %p92 = scmp.eq.s32.totalorder %s15, 0
    %p93 = por %p91, %p92
    %p94 = scmp.ne.s32.totalorder %s80, %s81
    %p95 = scmp.eq.s32.totalorder %s16, 3
    %p96 = por %p94, %p95
    %p98 = scmp.ne.s32.totalorder %s81, %s97
    %p99 = scmp.eq.s32.totalorder %s16, 0
    %p100 = por %p98, %p99
    %s102 = sadd.s32 %s101, 1
    %p105 = scmp.eq.s32.totalorder %s10, 3
    %p106 = scmp.ne.s32.totalorder %s101, %s103
    %p107 = scmp.eq.s32.totalorder %s10, 0
    %p108 = por %p106, %p107
    %p109 = scmp.ne.s32.totalorder %s101, %s103
    %p110 = scmp.eq.s32.totalorder %s15, 3
    %p111 = por %p109, %p110
    %p112 = scmp.ne.s32.totalorder %s103, %s104
    %p113 = scmp.eq.s32.totalorder %s15, 0
    %p114 = por %p112, %p113
    %p115 = scmp.ne.s32.totalorder %s103, %s104
    %p116 = scmp.eq.s32.totalorder %s16, 3
    %p117 = por %p115, %p116
    %p119 = scmp.ne.s32.totalorder %s104, %s118
    %p120 = scmp.eq.s32.totalorder %s16, 0
    %p121 = por %p119, %p120
    %s123 = sadd.s32 %s122, 1
    %p126 = scmp.eq.s32.totalorder %s10, 3
    %p127 = scmp.ne.s32.totalorder %s122, %s124
    %p128 = scmp.eq.s32.totalorder %s10, 0
    %p129 = por %p127, %p128
    %p130 = scmp.ne.s32.totalorder %s122, %s124
    %p131 = scmp.eq.s32.totalorder %s15, 3
    %p132 = por %p130, %p131
    %p133 = scmp.ne.s32.totalorder %s124, %s125
    %p134 = scmp.eq.s32.totalorder %s15, 0
    %p135 = por %p133, %p134
    %p136 = scmp.ne.s32.totalorder %s124, %s125
    %p137 = scmp.eq.s32.totalorder %s16, 3
    %p138 = por %p136, %p137
    %p140 = scmp.ne.s32.totalorder %s125, %s139
    %p141 = scmp.eq.s32.totalorder %s16, 0
    %p142 = por %p140, %p141
    %s143 = smul.u32 %s18, %s19
    %s144 = smul.u32 %s32, %s28
    %s145 = ssub.s32 %s17, %s36
    %s146 = ssub.s32 %s143, %s144
    %s147 = sor.u32 %s145, %s146
    %p148 = scmp.eq.s32.totalorder %s147, 0
    %s150 = sadd.s32 %s149, 1
    %s151 = scalar_select %p148, %s149, %s150
    %p154 = pneg %p148
    %p155 = scmp.eq.s32.totalorder %s10, 3
    %p156 = por %p154, %p155
    %p157 = scmp.ne.s32.totalorder %s149, %s152
    %p158 = scmp.eq.s32.totalorder %s10, 0
    %p159 = por %p157, %p158
    %p160 = scmp.ne.s32.totalorder %s149, %s152
    %p161 = scmp.eq.s32.totalorder %s15, 3
    %p162 = por %p160, %p161
    %p163 = scmp.ne.s32.totalorder %s152, %s153
    %p164 = scmp.eq.s32.totalorder %s15, 0
    %p165 = por %p163, %p164
    %p166 = scmp.ne.s32.totalorder %s152, %s153
    %p167 = scmp.eq.s32.totalorder %s16, 3
    %p168 = por %p166, %p167
    %p170 = scmp.ne.s32.totalorder %s153, %s169
    %p171 = scmp.eq.s32.totalorder %s16, 0
    %p172 = por %p170, %p171
    %p173 = scmp.le.s32.totalorder 1, %s10
    %p174 = scmp.lt.s32.totalorder %s10, 5
    %p175 = pnand %p173, %p174
    %p176 = pneg %p175
    // Predicated region
    $region9: #{linear_concat_gate.1} parent=5 // pred_check
      _
    $region10: #{linear_concat_gate.1} parent=5 // pred_check_branch
      %178 = sbr.rel (%p175) target = $region12
    $region11: #{linear_concat_gate.1} parent=5 // pred_region
      %s179 = ssub.s32 %s10, 1
      // Predicated region
      $region13: #{linear_concat_gate.1} parent=11 // pred_check
        %p180 = pneg %p114
      $region14: #{linear_concat_gate.1} parent=11 // pred_check_branch
        %182 = sbr.rel (%p180) target = $region16
      $region15: #{linear_concat_gate.1} parent=11 // pred_region
        _
      $region16: #{linear_concat_gate.1} parent=11 // pred_fallthru
        _
      // Predicated region
      $region17: #{linear_concat_gate.1} parent=11 // pred_check
        %p183 = pneg %p135
      $region18: #{linear_concat_gate.1} parent=11 // pred_check_branch
        %185 = sbr.rel (%p183) target = $region20
      $region19: #{linear_concat_gate.1} parent=11 // pred_region
        _
      $region20: #{linear_concat_gate.1} parent=11 // pred_fallthru
        _
    $region12: #{linear_concat_gate.1} parent=5 // pred_fallthru
      _
    %p186 = scmp.lt.s32.totalorder %s10, 4
    // Predicated region
    $region21: #{linear_concat_gate.1} parent=5 // pred_check
      %p187 = pneg %p186
    $region22: #{linear_concat_gate.1} parent=5 // pred_check_branch
      %189 = sbr.rel (%p187) target = $region24
    $region23: #{linear_concat_gate.1} parent=5 // pred_region
      // Predicated region
      $region25: #{linear_concat_gate.1} parent=23 // pred_check
        %p190 = pneg %p55
      $region26: #{linear_concat_gate.1} parent=23 // pred_check_branch
        %192 = sbr.rel (%p190) target = $region28
      $region27: #{linear_concat_gate.1} parent=23 // pred_region
        %s193 = ssub.s32 1, %s18
        %s194 = smul.u32 %s193, %s19
        %s195 = smul.u32 2, %s194
        %p196 = scmp.lt.s32.totalorder %s17, 1
        %s197 = scalar_select %p196, %s17, 1
        %p198 = scmp.lt.s32.totalorder %s195, 1
        %s199 = scalar_select %p198, %s195, 1
        %s200 = smul.addr %s197, 2
        %s201 = sadd.s32 %s199, %s200
        %s202 = smul.addr %s201, 8
        %s203 = scalar_lea.vmem %s0, %s202
        %s204 = ssub.s32 1, %s18
        %s205 = smul.u32 %s204, %s19
        %s206 = smul.u32 2, %s205
      $region28: #{linear_concat_gate.1} parent=23 // pred_fallthru
        _
      // Predicated region
      $region29: #{linear_concat_gate.1} parent=23 // pred_check
        %p207 = pneg %p87
      $region30: #{linear_concat_gate.1} parent=23 // pred_check_branch
        %209 = sbr.rel (%p207) target = $region32
      $region31: #{linear_concat_gate.1} parent=23 // pred_region
        %s210 = ssub.s32 1, %s18
        %s211 = smul.u32 %s210, %s19
        %s212 = smul.u32 2, %s211
        %p213 = scmp.lt.s32.totalorder %s17, 1
        %s214 = scalar_select %p213, %s17, 1
        %p215 = scmp.lt.s32.totalorder %s212, 1
        %s216 = scalar_select %p215, %s212, 1
        %s217 = smul.addr %s214, 2
        %s218 = sadd.s32 %s216, %s217
        %s219 = smul.addr %s218, 8
        %s220 = scalar_lea.vmem %s1, %s219
        %s221 = ssub.s32 1, %s18
        %s222 = smul.u32 %s221, %s19
        %s223 = smul.u32 2, %s222
      $region32: #{linear_concat_gate.1} parent=23 // pred_fallthru
        _
    $region24: #{linear_concat_gate.1} parent=5 // pred_fallthru
      _
    %p224 = scmp.le.s32.totalorder 1, %s10
    %p225 = scmp.lt.s32.totalorder %s10, 5
    %p226 = pnand %p224, %p225
    %p227 = pneg %p226
    // Predicated region
    $region33: #{linear_concat_gate.1} parent=5 // pred_check
      _
    $region34: #{linear_concat_gate.1} parent=5 // pred_check_branch
      %229 = sbr.rel (%p226) target = $region36
    $region35: #{linear_concat_gate.1} parent=5 // pred_region
      %s230 = ssub.s32 %s10, 1
      %s231 = ssub.s32 1, %s21
      %s232 = smul.u32 %s231, %s22
      %s233 = smul.u32 2, %s232
      %p234 = scmp.lt.s32.totalorder %s20, 1
      %s235 = scalar_select %p234, %s20, 1
      %p236 = scmp.lt.s32.totalorder %s233, 1
      %s237 = scalar_select %p236, %s233, 1
      %s238 = smul.addr %s235, 2
      %s239 = sadd.s32 %s237, %s238
      %s240 = smul.addr %s239, 8
      %s241 = scalar_lea.vmem %s0, %s240
      %p242 = pneg %p61
      %p243 = pneg %p58
      %s244 = ssub.s32 1, %s21
      %s245 = smul.u32 %s244, %s22
      %s246 = smul.u32 2, %s245
      %p247 = scmp.lt.s32.totalorder %s20, 1
      %s248 = scalar_select %p247, %s20, 1
      %p249 = scmp.lt.s32.totalorder %s246, 1
      %s250 = scalar_select %p249, %s246, 1
      %s251 = smul.addr %s248, 2
      %s252 = sadd.s32 %s250, %s251
      %s253 = smul.addr %s252, 8
      %s254 = scalar_lea.vmem %s1, %s253
      %p255 = pneg %p93
      %p256 = pneg %p90
      %p257 = pneg %p114
      %p258 = pneg %p111
      %p259 = pneg %p135
      %p260 = pneg %p132
      %p261 = pneg %p165
      %p262 = pneg %p162
      %s263 = smul.u32 %s21, %s22
      %s264 = smul.u32 2, %s263
      %p265 = scmp.lt.s32.totalorder %s20, 1
      %s266 = scalar_select %p265, %s20, 1
      %p267 = scmp.lt.s32.totalorder %s264, 1
      %s268 = scalar_select %p267, %s264, 1
      %s269 = smul.addr %s266, 2
      %s270 = sadd.s32 %s268, %s269
      %s271 = smul.addr %s270, 8
      %s272 = scalar_lea.vmem %s4, %s271
      %s273 = ssub.s32 1, %s21
      %s274 = smul.u32 %s273, %s22
      %s275 = smul.u32 2, %s274
      %p276 = scmp.lt.s32.totalorder %s20, 1
      %s277 = scalar_select %p276, %s20, 1
      %p278 = scmp.lt.s32.totalorder %s275, 1
      %s279 = scalar_select %p278, %s275, 1
      %s280 = smul.addr %s277, 2
      %s281 = sadd.s32 %s279, %s280
      %s282 = smul.addr %s281, 8
      %s283 = scalar_lea.vmem %s0, %s282
      %s284 = ssub.s32 1, %s21
      %s285 = smul.u32 %s284, %s22
      %s286 = smul.u32 2, %s285
      %s287 = ssub.s32 1, %s21
      %s288 = smul.u32 %s287, %s22
      %s289 = smul.u32 2, %s288
      %p290 = scmp.lt.s32.totalorder %s20, 1
      %s291 = scalar_select %p290, %s20, 1
      %p292 = scmp.lt.s32.totalorder %s289, 1
      %s293 = scalar_select %p292, %s289, 1
      %s294 = smul.addr %s291, 2
      %s295 = sadd.s32 %s293, %s294
      %s296 = smul.addr %s295, 8
      %s297 = scalar_lea.vmem %s1, %s296
      %s298 = ssub.s32 1, %s21
      %s299 = smul.u32 %s298, %s22
      %s300 = smul.u32 2, %s299
      %s301 = smul.u32 %s21, %s22
      %s302 = smul.u32 2, %s301
      %p303 = scmp.lt.s32.totalorder %s20, 1
      %s304 = scalar_select %p303, %s20, 1
      %p305 = scmp.lt.s32.totalorder %s302, 1
      %s306 = scalar_select %p305, %s302, 1
      %s307 = smul.addr %s304, 2
      %s308 = sadd.s32 %s306, %s307
      %s309 = smul.addr %s308, 8
      %s310 = scalar_lea.vmem %s4, %s309
      %s311 = smul.u32 %s21, %s22
      %s312 = smul.u32 2, %s311
      %p313 = scmp.eq.s32.totalorder %s21, 0
      // Predicated region
      $region37: #{linear_concat_gate.1} parent=35 // pred_check
        %p314 = pneg %p313
      $region38: #{linear_concat_gate.1} parent=35 // pred_check_branch
        %316 = sbr.rel (%p314) target = $region40
      $region39: #{linear_concat_gate.1} parent=35 // pred_region
        %p317 = scmp.eq.s32.totalorder %s22, 0
        // Predicated region
        $region41: #{linear_concat_gate.1} parent=39 // pred_check
          %p318 = pneg %p317
        $region42: #{linear_concat_gate.1} parent=39 // pred_check_branch
          %320 = sbr.rel (%p318) target = $region44
        $region43: #{linear_concat_gate.1} parent=39 // pred_region
          %321 = vst [vmem:[#allocation2] sm:$0xff] 0.0
          %322 = vst [vmem:[#allocation3] sm:$0xff] 0.0
        $region44: #{linear_concat_gate.1} parent=39 // pred_fallthru
          _
        %v323 = vld [vmem:[%s283] sm:$0xff]
        %v324 = vld [vmem:[%s283 + $0x8] sm:$0xff]
        %v325 = vld [vmem:[%s297] sm:$0xff]
        %v326 = vld [vmem:[%s297 + $0x8] sm:$0xff]
        %s327 = smul.u32 %s22, 2
        %s328 = smul.addr %s327, 8
        %s329 = scalar_lea.vmem [#allocation5], %s328
        %330 = vst [vmem:[%s329] sm:$0xff] %v323
        %331 = vst [vmem:[%s329 + $0x8] sm:$0xff] %v324
        %v332 = vadd.f32 %v323, %v324
        %v333 = vadd.f32 %v325, %v326
        %v334 = vld [vmem:[#allocation2] sm:$0xff]
        %v335 = vadd.f32 %v334, %v332
        %336 = vst [vmem:[#allocation2] sm:$0xff] %v335
        %v337 = vld [vmem:[#allocation3] sm:$0xff]
        %v338 = vadd.f32 %v337, %v333
        %339 = vst [vmem:[#allocation3] sm:$0xff] %v338
        // Predicated region
        $region45: #{linear_concat_gate.1} parent=39 // pred_check
          %p340 = pneg %p317
        $region46: #{linear_concat_gate.1} parent=39 // pred_check_branch
          %342 = sbr.rel (%p340) target = $region48
        $region47: #{linear_concat_gate.1} parent=39 // pred_region
          %v343 = vld [vmem:[#allocation2] sm:$0xff]
          %344 = vadd.xlane.f32.xlu0 %v343
          %v345 = vpop.xlane.xlu0 %344
          %v346 = vmul.f32 %v345, 0.00390625
          %v347 = vld [vmem:[#allocation3] sm:$0xff]
          %348 = vadd.xlane.f32.xlu0 %v347
          %v349 = vpop.xlane.xlu0 %348
          %v350 = vmul.f32 %v349, 0.00390625
          %v351 = vld [vmem:[%s2] sm:$0xff]
          %v352 = vld [vmem:[%s3] sm:$0xff]
          %v354 = vlaneseq
          %v355 = vand.u32 %v354, 127
          %v356 = vlaneseq
          %v357 = vshrl.u32 %v356, 7
          %v358 = vsub.s32 %v355, %v357
          %v359 = vrot.slane %v350, %v358
          %vm360 = vcmask 64512
          %v361 = vsel %vm360, %v359, 0
          %363 = vmatprep.subr.mxu0 0.0
          %364 = vmatpush1.msra.mxu0 %v352
          %365 = vmatprep.subr.mxu0 0.0
          %366 = vmatpush1.msra.mxu0 0.0
          %367 = vmatprep.subr.mxu0 0.0
          %368 = vmatpush1.msra.mxu0 0.0
          %369 = vmatprep.subr.mxu0 0.0
          %370 = vmatpush1.msra.mxu0 0.0
          %371 = vmatprep.subr.mxu0 0.0
          %372 = vmatpush1.msra.mxu0 0.0
          %373 = vmatprep.subr.mxu0 0.0
          %374 = vmatpush1.msra.mxu0 0.0
          %375 = vmatprep.subr.mxu0 0.0
          %376 = vmatpush1.msra.mxu0 0.0
          %377 = vmatprep.subr.mxu0 0.0
          %378 = vmatpush1.msra.mxu0 0.0
          %379 = vmatprep.subr.mxu0 0.0
          %380 = vmatpush1.msra.mxu0 0.0
          %381 = vmatprep.subr.mxu0 0.0
          %382 = vmatpush1.msra.mxu0 0.0
          %383 = vmatprep.subr.mxu0 0.0
          %384 = vmatpush1.msra.mxu0 0.0
          %385 = vmatprep.subr.mxu0 0.0
          %386 = vmatpush1.msra.mxu0 0.0
          %387 = vmatprep.subr.mxu0 0.0
          %388 = vmatpush1.msra.mxu0 0.0
          %389 = vmatprep.subr.mxu0 0.0
          %390 = vmatpush1.msra.mxu0 0.0
          %391 = vmatprep.subr.mxu0 0.0
          %392 = vmatpush1.msra.mxu0 0.0
          %393 = vmatprep.subr.mxu0 0.0
          %394 = vmatpush1.msra.mxu0 0.0
          %395 = vmatprep.subr.mxu0 0.0
          %396 = vmatpush1.msra.mxu0 0.0
          %397 = vmatprep.subr.mxu0 0.0
          %398 = vmatpush1.msra.mxu0 0.0
          %399 = vmatprep.subr.mxu0 0.0
          %400 = vmatpush1.msra.mxu0 0.0
          %401 = vmatprep.subr.mxu0 0.0
          %402 = vmatpush1.msra.mxu0 0.0
          %403 = vmatprep.subr.mxu0 0.0
          %404 = vmatpush1.msra.mxu0 0.0
          %405 = vmatprep.subr.mxu0 0.0
          %406 = vmatpush1.msra.mxu0 0.0
          %407 = vmatprep.subr.mxu0 0.0
          %408 = vmatpush1.msra.mxu0 0.0
          %409 = vmatprep.subr.mxu0 0.0
          %410 = vmatpush1.msra.mxu0 0.0
          %411 = vmatprep.subr.mxu0 0.0
          %412 = vmatpush1.msra.mxu0 0.0
          %413 = vmatprep.subr.mxu0 0.0
          %414 = vmatpush1.msra.mxu0 0.0
          %415 = vmatprep.subr.mxu0 0.0
          %416 = vmatpush1.msra.mxu0 0.0
          %417 = vmatprep.subr.mxu0 0.0
          %418 = vmatpush1.msra.mxu0 0.0
          %419 = vmatprep.subr.mxu0 0.0
          %420 = vmatpush1.msra.mxu0 0.0
          %421 = vmatprep.subr.mxu0 0.0
          %422 = vmatpush1.msra.mxu0 0.0
          %423 = vmatprep.subr.mxu0 0.0
          %424 = vmatpush1.msra.mxu0 0.0
          %425 = vmatprep.subr.mxu0 0.0
          %426 = vmatpush1.msra.mxu0 0.0
          %427 = vmatprep.mubr.f32.mxu0 0.0
          %428 = vmatmul.mubr.f32.gmra.mrb[0].mxu0 %v361
          %v429 = vpop.f32.mrb[0].mxu0
          %v430 = vadd.f32 0.0, %v429
          %v431 = vpop.f32.mrb[0].mxu0
          %432 = vdwg.mxu0
          %v434 = vlaneseq
          %v435 = vshrl.u32 %v434, 7
          %v436 = vsub.s32 %v355, %v435
          %v437 = vrot.slane %v346, %v436
          %v438 = vsel %vm360, %v437, 0
          %440 = vmatprep.subr.mxu0 0.0
          %441 = vmatpush1.msra.mxu0 %v351
          %442 = vmatprep.subr.mxu0 0.0
          %443 = vmatpush1.msra.mxu0 0.0
          %444 = vmatprep.subr.mxu0 0.0
          %445 = vmatpush1.msra.mxu0 0.0
          %446 = vmatprep.subr.mxu0 0.0
          %447 = vmatpush1.msra.mxu0 0.0
          %448 = vmatprep.subr.mxu0 0.0
          %449 = vmatpush1.msra.mxu0 0.0
          %450 = vmatprep.subr.mxu0 0.0
          %451 = vmatpush1.msra.mxu0 0.0
          %452 = vmatprep.subr.mxu0 0.0
          %453 = vmatpush1.msra.mxu0 0.0
          %454 = vmatprep.subr.mxu0 0.0
          %455 = vmatpush1.msra.mxu0 0.0
          %456 = vmatprep.subr.mxu0 0.0
          %457 = vmatpush1.msra.mxu0 0.0
          %458 = vmatprep.subr.mxu0 0.0
          %459 = vmatpush1.msra.mxu0 0.0
          %460 = vmatprep.subr.mxu0 0.0
          %461 = vmatpush1.msra.mxu0 0.0
          %462 = vmatprep.subr.mxu0 0.0
          %463 = vmatpush1.msra.mxu0 0.0
          %464 = vmatprep.subr.mxu0 0.0
          %465 = vmatpush1.msra.mxu0 0.0
          %466 = vmatprep.subr.mxu0 0.0
          %467 = vmatpush1.msra.mxu0 0.0
          %468 = vmatprep.subr.mxu0 0.0
          %469 = vmatpush1.msra.mxu0 0.0
          %470 = vmatprep.subr.mxu0 0.0
          %471 = vmatpush1.msra.mxu0 0.0
          %472 = vmatprep.subr.mxu0 0.0
          %473 = vmatpush1.msra.mxu0 0.0
          %474 = vmatprep.subr.mxu0 0.0
          %475 = vmatpush1.msra.mxu0 0.0
          %476 = vmatprep.subr.mxu0 0.0
          %477 = vmatpush1.msra.mxu0 0.0
          %478 = vmatprep.subr.mxu0 0.0
          %479 = vmatpush1.msra.mxu0 0.0
          %480 = vmatprep.subr.mxu0 0.0
          %481 = vmatpush1.msra.mxu0 0.0
          %482 = vmatprep.subr.mxu0 0.0
          %483 = vmatpush1.msra.mxu0 0.0
          %484 = vmatprep.subr.mxu0 0.0
          %485 = vmatpush1.msra.mxu0 0.0
          %486 = vmatprep.subr.mxu0 0.0
          %487 = vmatpush1.msra.mxu0 0.0
          %488 = vmatprep.subr.mxu0 0.0
          %489 = vmatpush1.msra.mxu0 0.0
          %490 = vmatprep.subr.mxu0 0.0
          %491 = vmatpush1.msra.mxu0 0.0
          %492 = vmatprep.subr.mxu0 0.0
          %493 = vmatpush1.msra.mxu0 0.0
          %494 = vmatprep.subr.mxu0 0.0
          %495 = vmatpush1.msra.mxu0 0.0
          %496 = vmatprep.subr.mxu0 0.0
          %497 = vmatpush1.msra.mxu0 0.0
          %498 = vmatprep.subr.mxu0 0.0
          %499 = vmatpush1.msra.mxu0 0.0
          %500 = vmatprep.subr.mxu0 0.0
          %501 = vmatpush1.msra.mxu0 0.0
          %502 = vmatprep.subr.mxu0 0.0
          %503 = vmatpush1.msra.mxu0 0.0
          %504 = vmatprep.mubr.f32.mxu0 0.0
          %505 = vmatmul.mubr.f32.gmra.mrb[0].mxu0 %v438
          %v506 = vpop.f32.mrb[0].mxu0
          %v507 = vadd.f32 %v430, %v506
          %v508 = vpop.f32.mrb[0].mxu0
          %509 = vdwg.mxu0
          %v510 = vxor.u32 %v507, 2147483648
          %v511 = vmul.f32 %v510, 1.442695
          %v512 = vpow.pop %v511
          %v513 = vadd.f32 %v512, 1.0
          %v514 = vrcp.pop %v513
          %v515 = vmul.f32 1.0, %v514
          %v516 = vlaneseq
          %v517 = vshrl.u32 %v516, 7
          %v518 = vsub.s32 0, %v517
          %v519 = vrot.slane %v515, %v518
          %521 = vbcast.lane.b32.xlu0 %v519, 256
          %v522 = vpop.permute.xlu0 %521
          %vm523 = vcmask 7168
          %524 = vst.msk [vmem:[#allocation4] sm:$0xff] %vm523, %v522
        $region48: #{linear_concat_gate.1} parent=39 // pred_fallthru
          _
      $region40: #{linear_concat_gate.1} parent=35 // pred_fallthru
        _
      %p525 = scmp.eq.s32.totalorder %s21, 1
      // Predicated region
      $region49: #{linear_concat_gate.1} parent=35 // pred_check
        %p526 = pneg %p525
      $region50: #{linear_concat_gate.1} parent=35 // pred_check_branch
        %528 = sbr.rel (%p526) target = $region52
      $region51: #{linear_concat_gate.1} parent=35 // pred_region
        %s529 = smul.u32 %s22, 2
        %s530 = smul.addr %s529, 8
        %s531 = scalar_lea.vmem [#allocation5], %s530
        %v532 = vld [vmem:[%s531] sm:$0xff]
        %v533 = vld [vmem:[%s531 + $0x8] sm:$0xff]
        %v534 = vld [vmem:[#allocation4] sm:$0xff]
        %536 = vset.pattern.permute.xlu0 0
        %537 = vperm.xlu0 %536, %v534
        %v538 = vpop.permute.xlu0 %537
        %v540 = vmul.f32 %v532, %v538
        %v541 = vmul.f32 %v533, %v538
        %542 = vst [vmem:[%s310] sm:$0xff] %v540
        %543 = vst [vmem:[%s310 + $0x8] sm:$0xff] %v541
      $region52: #{linear_concat_gate.1} parent=35 // pred_fallthru
        _
      %s544 = smul.u32 %s21, %s22
      %s545 = smul.u32 2, %s544
      %p546 = scmp.lt.s32.totalorder %s20, 1
      %s547 = scalar_select %p546, %s20, 1
      %p548 = scmp.lt.s32.totalorder %s545, 1
      %s549 = scalar_select %p548, %s545, 1
      %s550 = smul.addr %s547, 2
      %s551 = sadd.s32 %s549, %s550
      %s552 = smul.addr %s551, 8
      %s553 = scalar_lea.vmem %s4, %s552
      // Predicated region
      $region53: #{linear_concat_gate.1} parent=35 // pred_check
        %p554 = pneg %p162
      $region54: #{linear_concat_gate.1} parent=35 // pred_check_branch
        %556 = sbr.rel (%p554) target = $region56
      $region55: #{linear_concat_gate.1} parent=35 // pred_region
        %s557 = smul.u32 %s21, %s22
        %s558 = smul.u32 2, %s557
      $region56: #{linear_concat_gate.1} parent=35 // pred_fallthru
        _
    $region36: #{linear_concat_gate.1} parent=5 // pred_fallthru
      _
    %p559 = scmp.le.s32.totalorder 2, %s10
    // Predicated region
    $region57: #{linear_concat_gate.1} parent=5 // pred_check
      %p560 = pneg %p559
    $region58: #{linear_concat_gate.1} parent=5 // pred_check_branch
      %562 = sbr.rel (%p560) target = $region60
    $region59: #{linear_concat_gate.1} parent=5 // pred_region
      %s563 = ssub.s32 %s10, 2
      // Predicated region
      $region61: #{linear_concat_gate.1} parent=59 // pred_check
        %p564 = pneg %p168
      $region62: #{linear_concat_gate.1} parent=59 // pred_check_branch
        %566 = sbr.rel (%p564) target = $region64
      $region63: #{linear_concat_gate.1} parent=59 // pred_region
        %s567 = smul.u32 %s24, %s25
        %s568 = smul.u32 2, %s567
        %p569 = scmp.lt.s32.totalorder %s23, 1
        %s570 = scalar_select %p569, %s23, 1
        %p571 = scmp.lt.s32.totalorder %s568, 1
        %s572 = scalar_select %p571, %s568, 1
        %s573 = smul.addr %s570, 2
        %s574 = sadd.s32 %s572, %s573
        %s575 = smul.addr %s574, 8
        %s576 = scalar_lea.vmem %s4, %s575
      $region64: #{linear_concat_gate.1} parent=59 // pred_fallthru
        _
    $region60: #{linear_concat_gate.1} parent=5 // pred_fallthru
      _
  $region6: #{linear_concat_gate.1} parent=0 // loop_footer
    %s14 = sadd.s32 1, %s10
  $region7: #{linear_concat_gate.1} parent=0 // loop_footer_branch
    %9 = sbr.rel target = $region3
  $region8: #{linear_concat_gate.1} parent=0 // loop_exit
    _

</llo_original>
